<compile_context>
chip_gen: v6e
topology: v6e:2x2x1
jax: 0.10.0
libtpu: 0.0.40
codegen_flags: <defaults>
</compile_context>

<pallas_src>
import functools

import jax
import jax.numpy as jnp
from jax.experimental import pallas as pl
from jax.experimental.pallas import tpu as pltpu

# ----------------------------------------------------------------------------
# Hero table from the original module (used only to derive num_heroes).
# ----------------------------------------------------------------------------
heroes_correspondances = {0: 'darkstar', 1: 'xesha', 2: 'tempus', 3: 'judge', 4: 'tristan', 5: 'corvus', 6: 'galaad', 7: 'mushy', 8: 'helios', 9: 'martha', 10: 'phobos', 11: 'kai', 12: 'andvari', 13: 'kayla', 14: 'mojo', 15: 'krista', 16: 'jhu', 17: 'aidan', 18: 'iris', 19: 'julius', 20: 'jorgen', 21: 'cornelius', 22: 'yasmine', 23: 'astaroth', 24: 'luther', 25: 'faceless', 26: 'celeste', 27: 'dante', 28: 'ziri', 29: 'chabba', 30: 'oya', 31: 'octavia', 32: 'morrigan', 33: 'cleaver', 34: 'qingmao', 35: 'maya', 36: 'keira', 37: 'nebula', 38: 'fox', 39: 'marcus', 40: 'karkh', 41: 'orion', 42: 'jet', 43: 'lian', 44: 'sun', 45: 'aurora', 46: 'rufus', 47: 'lilith', 48: 'fafnir', 49: 'heidi', 50: 'amira', 51: 'ginger', 52: 'lars', 53: 'peppy', 54: 'satori', 55: 'elmir', 56: 'alvanor', 57: 'astridlucas', 58: 'sebastian', 59: 'daredevil', 60: 'arachne', 61: 'cascade', 62: 'ginger', 63: 'thea', 64: 'ishmael', 65: 'isaac', 66: 'folio', 67: 'artemis', 68: 'dorian', 69: 'mojo', 70: 'thea', 71: 'aidan', 72: 'arachne', 73: 'galaad', 74: 'fox', 75: 'yasmine', 76: 'aurora', 77: 'kayla', 78: 'qingmao', 79: 'cleaver', 80: 'kai', 81: 'peech', 82: 'thea', 83: 'jet', 84: 'amira', 85: 'chabba', 86: 'phobos', 87: 'dante', 88: 'mushy', 89: 'lars', 90: 'alvanor', 91: 'lilith', 92: 'polaris', 93: 'polaris', 94: 'artemis', 95: 'guus'}

# Matches the original: num_heroes = len(bidict over sorted(set(names))).
NUM_HEROES = len(set(heroes_correspondances.values()))
HIDDEN_DIM = 32
LEAKY_SLOPE = 0.1
MAX_TILE_B = 2048   # rows per grid step for large batches (multiple of 128)
SMALL_BATCH = 256   # <= this: single full-array block (latency-floor regime)


def _round_up(x, m):
    return (x + m - 1) // m * m


def _leaky_relu(x, slope=LEAKY_SLOPE):
    return jnp.where(x > 0, x, slope * x)


def _sigmoid(x):
    # Explicit formula (exp + divide) to keep the Mosaic lowering simple and
    # numerically identical to the pure-JAX reference.
    return 1.0 / (1.0 + jnp.exp(-x))


# ----------------------------------------------------------------------------
# Kernel: one batch tile per grid step.
# ----------------------------------------------------------------------------
def fight_predictor_kernel(left_ref, right_ref, w_ref, b_ref, out_ref):
    """left_ref/right_ref: (TILE_B, num_heroes), caller's transport dtype.
       w_ref:  (HPAD + 5*H + 8, H) bf16 packed weight slab (VMEM-pinned).
       b_ref:  (8, H) f32 packed bias slab (VMEM-pinned).
       out_ref:(1, TILE_B) f32 lane-dense win probabilities."""
    nh = left_ref.shape[1]
    hidden = w_ref.shape[1]
    hpad = w_ref.shape[0] - 5 * hidden - 8

    # --- unpack parameter slabs (static slices; section offsets 16-aligned) --
    te_w1 = w_ref[0:nh, :]                         # only the real hero rows
    o = hpad
    te_w2 = w_ref[o:o + hidden, :]; o += hidden
    te_w3 = w_ref[o:o + hidden, :]; o += hidden
    fc_w1a = w_ref[o:o + hidden, :]; o += hidden
    fc_w1b = w_ref[o:o + hidden, :]; o += hidden
    fc_w2 = w_ref[o:o + hidden, :]; o += hidden
    fc_w3t = w_ref[o:o + 8, :]                     # (8, H); row 0 = fc_w3.T

    te_b1 = b_ref[0:1, :]
    te_b2 = b_ref[1:2, :]
    te_b3 = b_ref[2:3, :]
    fc_b1 = b_ref[3:4, :]
    fc_b2 = b_ref[4:5, :]
    fc_b3 = b_ref[5:6, 0:1]                        # (1, 1)

    def mm(a, w):
        # bf16 x bf16 on the MXU, f32 accumulation.
        return jnp.dot(a.astype(w.dtype), w, preferred_element_type=jnp.float32)

    def encode(team_ref):
        # Transport dtype (int8/bf16/f32) -> f32 on the VPU; mm casts to bf16.
        x = team_ref[...].astype(jnp.float32)      # (TILE_B, nh)
        h = _leaky_relu(mm(x, te_w1) + te_b1)
        h = _leaky_relu(mm(h, te_w2) + te_b2)
        return _leaky_relu(mm(h, te_w3) + te_b3)   # (TILE_B, H) f32

    # Shared team encoder applied to each team (same weights).
    left_enc = encode(left_ref)
    right_enc = encode(right_ref)

    # --- final MLP (axis=1 concat removed via split fc_w1) -------------------
    g = _leaky_relu(mm(left_enc, fc_w1a) + mm(right_enc, fc_w1b) + fc_b1)
    g = _leaky_relu(mm(g, fc_w2) + fc_b2)          # (TILE_B, H) f32

    # Head computed transposed so the store is lane-dense: (8,H) . (TILE_B,H)^T.
    logit_t = jax.lax.dot_general(
        fc_w3t, g.astype(fc_w3t.dtype),
        dimension_numbers=(((1,), (1,)), ((), ())),
        preferred_element_type=jnp.float32)        # (8, TILE_B); row 0 is real
    out_ref[...] = _sigmoid(logit_t[0:1, :] + fc_b3)


# ----------------------------------------------------------------------------
# Parameters (PyTorch-Linear-equivalent, stored transposed: y = x @ W + b).
# ----------------------------------------------------------------------------
def make_params(key, num_heroes, hidden_dim):
    ks = jax.random.split(key, 12)
    scale = 0.05

    def w(k, fan_in, fan_out):
        return (scale * jax.random.normal(k, (fan_in, fan_out))).astype(jnp.float32)

    def b(k, fan_out):
        return (scale * jax.random.normal(k, (1, fan_out))).astype(jnp.float32)

    return dict(
        te_w1=w(ks[0], num_heroes, hidden_dim), te_b1=b(ks[1], hidden_dim),
        te_w2=w(ks[2], hidden_dim, hidden_dim), te_b2=b(ks[3], hidden_dim),
        te_w3=w(ks[4], hidden_dim, hidden_dim), te_b3=b(ks[5], hidden_dim),
        fc_w1=w(ks[6], 2 * hidden_dim, hidden_dim), fc_b1=b(ks[7], hidden_dim),
        fc_w2=w(ks[8], hidden_dim, hidden_dim), fc_b2=b(ks[9], hidden_dim),
        fc_w3=w(ks[10], hidden_dim, 1), fc_b3=b(ks[11], 1),
    )


def _pack_params(p, num_heroes, hidden, hpad):
    """Pack the 12 params into one bf16 weight slab and one f32 bias slab."""
    te_w1_p = jnp.zeros((hpad, hidden), jnp.float32).at[:num_heroes, :].set(p["te_w1"])
    fc_w3t = jnp.zeros((8, hidden), jnp.float32).at[0:1, :].set(p["fc_w3"].T)
    w_slab = jnp.concatenate(
        [te_w1_p, p["te_w2"], p["te_w3"],
         p["fc_w1"][:hidden, :], p["fc_w1"][hidden:, :], p["fc_w2"], fc_w3t],
        axis=0).astype(jnp.bfloat16)                          # (hpad+5H+8, H)

    fc_b3_row = jnp.zeros((1, hidden), jnp.float32).at[0, 0].set(p["fc_b3"][0, 0])
    b_slab = jnp.concatenate(
        [p["te_b1"], p["te_b2"], p["te_b3"], p["fc_b1"], p["fc_b2"], fc_b3_row,
         jnp.zeros((2, hidden), jnp.float32)], axis=0)        # (8, H)
    return w_slab, b_slab


# ----------------------------------------------------------------------------
# Wrapper: direct (zero-copy) team inputs, batch grid, pinned params,
# lane-dense output.
# ----------------------------------------------------------------------------
@functools.partial(jax.jit, static_argnames=("max_tile_b",))
def fight_predictor(left_team, right_team, params, *, max_tile_b=MAX_TILE_B):
    assert left_team.shape == right_team.shape
    batch, num_heroes = left_team.shape
    hidden = params["te_b1"].shape[1]
    hpad = _round_up(num_heroes, 128)     # te_w1 section rows inside the slab

    # Batch tiling:
    #   * small batch: one full-array block (no alignment constraints, 1 step);
    #   * large batch: >= 2 grid steps so both v7x TensorCores get work, with
    #     tiles capped at max_tile_b (amortizes the ~0.35us/step overhead on
    #     v5e/v6e; per-step VMEM is only ~2*tile*num_heroes input bytes).
    if batch <= SMALL_BATCH:
        tile = batch
    else:
        assert max_tile_b % 128 == 0
        tile = min(max_tile_b, _round_up(pl.cdiv(batch, 2), 128))
    nt = pl.cdiv(batch, tile)
    b_pad = nt * tile  # boundary block may over-read; garbage rows are sliced off

    w_slab, b_slab = _pack_params(params, num_heroes, hidden, hpad)

    out = pl.pallas_call(
        fight_predictor_kernel,
        out_shape=jax.ShapeDtypeStruct((1, b_pad), jnp.float32),
        grid=(nt,),
        in_specs=[
            # Teams DMA'd directly in their transport dtype; last block dim is
            # the full (unpadded) hero dim, so it is legal and copy-free.
            pl.BlockSpec((tile, num_heroes), lambda i: (i, 0)),
            pl.BlockSpec((tile, num_heroes), lambda i: (i, 0)),
            pl.BlockSpec(w_slab.shape, lambda i: (0, 0)),   # pinned: DMA'd once
            pl.BlockSpec(b_slab.shape, lambda i: (0, 0)),   # pinned: DMA'd once
        ],
        out_specs=pl.BlockSpec((1, tile), lambda i: (0, i)),  # lane-dense row
        compiler_params=pltpu.CompilerParams(
            dimension_semantics=("parallel",)),               # megacore sharding
    )(left_team, right_team, w_slab, b_slab)

    return out[0, :batch].reshape(batch, 1)


# ----------------------------------------------------------------------------
# Pure-JAX reference (compute_dtype=bfloat16 mirrors the kernel's casts).
# ----------------------------------------------------------------------------
def fight_predictor_ref(left_team, right_team, p, compute_dtype=jnp.float32):
    def mm(a, w):
        return jnp.dot(a.astype(compute_dtype), w.astype(compute_dtype),
                       preferred_element_type=jnp.float32)

    def encode(x):
        h = _leaky_relu(mm(x, p["te_w1"]) + p["te_b1"])
        h = _leaky_relu(mm(h, p["te_w2"]) + p["te_b2"])
        return _leaky_relu(mm(h, p["te_w3"]) + p["te_b3"])

    hidden = p["te_b1"].shape[1]
    le, re = encode(left_team), encode(right_team)
    h = _leaky_relu(mm(le, p["fc_w1"][:hidden]) + mm(re, p["fc_w1"][hidden:])
                    + p["fc_b1"])
    h = _leaky_relu(mm(h, p["fc_w2"]) + p["fc_b2"])
    return _sigmoid(mm(h, p["fc_w3"]) + p["fc_b3"])


if __name__ == "__main__":
    key = jax.random.PRNGKey(0)
    k_params, k1, k2, k3, k4 = jax.random.split(key, 5)
    params = make_params(k_params, NUM_HEROES, HIDDEN_DIM)

    # --- small single-tile run: 32 fights, int8 0/1 team indicators ----------
    batch = 32
    left = (jax.random.uniform(k1, (batch, NUM_HEROES)) < 0.06).astype(jnp.int8)
    right = (jax.random.uniform(k2, (batch, NUM_HEROES)) < 0.06).astype(jnp.int8)

    out = jax.block_until_ready(fight_predictor(left, right, params))
    assert out.shape == (batch, 1)
    assert bool(jnp.all(jnp.isfinite(out)))

    # Tight check vs. a reference mirroring the kernel's bf16 casts (f32 accum),
    # plus a loose sanity check vs. pure-f32 semantics.
    ref_bf16 = fight_predictor_ref(left, right, params, compute_dtype=jnp.bfloat16)
    ref_f32 = fight_predictor_ref(left, right, params, compute_dtype=jnp.float32)
    assert jnp.allclose(out, ref_bf16, atol=1e-5, rtol=1e-5), \
        float(jnp.max(jnp.abs(out - ref_bf16)))
    assert jnp.allclose(out, ref_f32, atol=1e-2, rtol=1e-2)

    # --- exercise the 2-step batch grid (v7x dual-TC path) at small scale ----
    batch2 = 512   # tile=256, grid=(2,), divides evenly
    left2 = (jax.random.uniform(k3, (batch2, NUM_HEROES)) < 0.06).astype(jnp.int8)
    right2 = (jax.random.uniform(k4, (batch2, NUM_HEROES)) < 0.06).astype(jnp.int8)
    out2 = jax.block_until_ready(fight_predictor(left2, right2, params))
    ref2 = fight_predictor_ref(left2, right2, params, compute_dtype=jnp.bfloat16)
    assert out2.shape == (batch2, 1)
    assert jnp.allclose(out2, ref2, atol=1e-5, rtol=1e-5)

    print("KERNEL_OK")
</pallas_src>

<mosaic_0001>
module attributes {stable_mosaic.version = 11 : i64} {
  func.func @fight_predictor_kernel(%arg0: i32, %arg1: memref<32x71xi8, #tpu.memory_space<vmem>>, %arg2: memref<32x71xi8, #tpu.memory_space<vmem>>, %arg3: memref<296x32xbf16, #tpu.memory_space<vmem>>, %arg4: memref<8x32xf32, #tpu.memory_space<vmem>>, %arg5: memref<1x32xf32, #tpu.memory_space<vmem>>) attributes {dimension_semantics = [#tpu.dimension_semantics<parallel>], iteration_bounds = array<i64: 1>, scalar_prefetch = 0 : i64, scratch_operands = 0 : i64, tpu.core_type = #tpu.core_type<tc>, window_params = [{transform_indices = @transform_0, window_bounds = array<i64: 32, 71>}, {transform_indices = @transform_1, window_bounds = array<i64: 32, 71>}, {pipeline_mode = #tpu.pipeline_mode<synchronous>, transform_indices = @transform_2, window_bounds = array<i64: 296, 32>}, {pipeline_mode = #tpu.pipeline_mode<synchronous>, transform_indices = @transform_3, window_bounds = array<i64: 8, 32>}, {transform_indices = @transform_4, window_bounds = array<i64: 1, 32>}]} {
    %c0 = arith.constant 0 : index
    %c0_0 = arith.constant 0 : index
    %0 = vector.load %arg3[%c0, %c0_0] : memref<296x32xbf16, #tpu.memory_space<vmem>>, vector<71x32xbf16>
    %c128 = arith.constant 128 : index
    %c0_1 = arith.constant 0 : index
    %1 = vector.load %arg3[%c128, %c0_1] : memref<296x32xbf16, #tpu.memory_space<vmem>>, vector<32x32xbf16>
    %c160 = arith.constant 160 : index
    %c0_2 = arith.constant 0 : index
    %2 = vector.load %arg3[%c160, %c0_2] : memref<296x32xbf16, #tpu.memory_space<vmem>>, vector<32x32xbf16>
    %c192 = arith.constant 192 : index
    %c0_3 = arith.constant 0 : index
    %3 = vector.load %arg3[%c192, %c0_3] : memref<296x32xbf16, #tpu.memory_space<vmem>>, vector<32x32xbf16>
    %c224 = arith.constant 224 : index
    %c0_4 = arith.constant 0 : index
    %4 = vector.load %arg3[%c224, %c0_4] : memref<296x32xbf16, #tpu.memory_space<vmem>>, vector<32x32xbf16>
    %c256 = arith.constant 256 : index
    %c0_5 = arith.constant 0 : index
    %5 = vector.load %arg3[%c256, %c0_5] : memref<296x32xbf16, #tpu.memory_space<vmem>>, vector<32x32xbf16>
    %c288 = arith.constant 288 : index
    %c0_6 = arith.constant 0 : index
    %6 = vector.load %arg3[%c288, %c0_6] : memref<296x32xbf16, #tpu.memory_space<vmem>>, vector<8x32xbf16>
    %c0_7 = arith.constant 0 : index
    %c0_8 = arith.constant 0 : index
    %7 = vector.load %arg4[%c0_7, %c0_8] : memref<8x32xf32, #tpu.memory_space<vmem>>, vector<1x32xf32>
    %c1 = arith.constant 1 : index
    %c0_9 = arith.constant 0 : index
    %8 = vector.load %arg4[%c1, %c0_9] : memref<8x32xf32, #tpu.memory_space<vmem>>, vector<1x32xf32>
    %c2 = arith.constant 2 : index
    %c0_10 = arith.constant 0 : index
    %9 = vector.load %arg4[%c2, %c0_10] : memref<8x32xf32, #tpu.memory_space<vmem>>, vector<1x32xf32>
    %c3 = arith.constant 3 : index
    %c0_11 = arith.constant 0 : index
    %10 = vector.load %arg4[%c3, %c0_11] : memref<8x32xf32, #tpu.memory_space<vmem>>, vector<1x32xf32>
    %c4 = arith.constant 4 : index
    %c0_12 = arith.constant 0 : index
    %11 = vector.load %arg4[%c4, %c0_12] : memref<8x32xf32, #tpu.memory_space<vmem>>, vector<1x32xf32>
    %c5 = arith.constant 5 : index
    %c0_13 = arith.constant 0 : index
    %12 = vector.load %arg4[%c5, %c0_13] : memref<8x32xf32, #tpu.memory_space<vmem>>, vector<1x1xf32>
    %c0_14 = arith.constant 0 : index
    %c0_15 = arith.constant 0 : index
    %13 = vector.load %arg1[%c0_14, %c0_15] : memref<32x71xi8, #tpu.memory_space<vmem>>, vector<32x71xi8>
    %14 = arith.sitofp %13 : vector<32x71xi8> to vector<32x71xf32>
    %15 = arith.truncf %14 : vector<32x71xf32> to vector<32x71xbf16>
    %cst = arith.constant dense<0.000000e+00> : vector<32x32xf32>
    %16 = tpu.matmul %15, %0, %cst {dimension_numbers = #tpu.dot_dimension_numbers<[1], [0], [0], [1], [0, 0, 1, 1], [], []>} : vector<32x71xbf16>, vector<71x32xbf16>, vector<32x32xf32> -> vector<32x32xf32>
    %17 = vector.broadcast %7 : vector<1x32xf32> to vector<32x32xf32>
    %18 = arith.addf %16, %17 : vector<32x32xf32>
    %cst_16 = arith.constant 0.000000e+00 : f32
    %19 = vector.broadcast %cst_16 : f32 to vector<32x32xf32>
    %20 = arith.cmpf ogt, %18, %19 : vector<32x32xf32>
    %cst_17 = arith.constant 1.000000e-01 : f32
    %21 = vector.broadcast %cst_17 : f32 to vector<32x32xf32>
    %22 = arith.mulf %21, %18 : vector<32x32xf32>
    %23 = arith.select %20, %18, %22 : vector<32x32xi1>, vector<32x32xf32>
    %24 = arith.truncf %23 : vector<32x32xf32> to vector<32x32xbf16>
    %cst_18 = arith.constant dense<0.000000e+00> : vector<32x32xf32>
    %25 = tpu.matmul %24, %1, %cst_18 {dimension_numbers = #tpu.dot_dimension_numbers<[1], [0], [0], [1], [0, 0, 1, 1], [], []>} : vector<32x32xbf16>, vector<32x32xbf16>, vector<32x32xf32> -> vector<32x32xf32>
    %26 = vector.broadcast %8 : vector<1x32xf32> to vector<32x32xf32>
    %27 = arith.addf %25, %26 : vector<32x32xf32>
    %cst_19 = arith.constant 0.000000e+00 : f32
    %28 = vector.broadcast %cst_19 : f32 to vector<32x32xf32>
    %29 = arith.cmpf ogt, %27, %28 : vector<32x32xf32>
    %cst_20 = arith.constant 1.000000e-01 : f32
    %30 = vector.broadcast %cst_20 : f32 to vector<32x32xf32>
    %31 = arith.mulf %30, %27 : vector<32x32xf32>
    %32 = arith.select %29, %27, %31 : vector<32x32xi1>, vector<32x32xf32>
    %33 = arith.truncf %32 : vector<32x32xf32> to vector<32x32xbf16>
    %cst_21 = arith.constant dense<0.000000e+00> : vector<32x32xf32>
    %34 = tpu.matmul %33, %2, %cst_21 {dimension_numbers = #tpu.dot_dimension_numbers<[1], [0], [0], [1], [0, 0, 1, 1], [], []>} : vector<32x32xbf16>, vector<32x32xbf16>, vector<32x32xf32> -> vector<32x32xf32>
    %35 = vector.broadcast %9 : vector<1x32xf32> to vector<32x32xf32>
    %36 = arith.addf %34, %35 : vector<32x32xf32>
    %cst_22 = arith.constant 0.000000e+00 : f32
    %37 = vector.broadcast %cst_22 : f32 to vector<32x32xf32>
    %38 = arith.cmpf ogt, %36, %37 : vector<32x32xf32>
    %cst_23 = arith.constant 1.000000e-01 : f32
    %39 = vector.broadcast %cst_23 : f32 to vector<32x32xf32>
    %40 = arith.mulf %39, %36 : vector<32x32xf32>
    %41 = arith.select %38, %36, %40 : vector<32x32xi1>, vector<32x32xf32>
    %c0_24 = arith.constant 0 : index
    %c0_25 = arith.constant 0 : index
    %42 = vector.load %arg2[%c0_24, %c0_25] : memref<32x71xi8, #tpu.memory_space<vmem>>, vector<32x71xi8>
    %43 = arith.sitofp %42 : vector<32x71xi8> to vector<32x71xf32>
    %44 = arith.truncf %43 : vector<32x71xf32> to vector<32x71xbf16>
    %cst_26 = arith.constant dense<0.000000e+00> : vector<32x32xf32>
    %45 = tpu.matmul %44, %0, %cst_26 {dimension_numbers = #tpu.dot_dimension_numbers<[1], [0], [0], [1], [0, 0, 1, 1], [], []>} : vector<32x71xbf16>, vector<71x32xbf16>, vector<32x32xf32> -> vector<32x32xf32>
    %46 = vector.broadcast %7 : vector<1x32xf32> to vector<32x32xf32>
    %47 = arith.addf %45, %46 : vector<32x32xf32>
    %cst_27 = arith.constant 0.000000e+00 : f32
    %48 = vector.broadcast %cst_27 : f32 to vector<32x32xf32>
    %49 = arith.cmpf ogt, %47, %48 : vector<32x32xf32>
    %cst_28 = arith.constant 1.000000e-01 : f32
    %50 = vector.broadcast %cst_28 : f32 to vector<32x32xf32>
    %51 = arith.mulf %50, %47 : vector<32x32xf32>
    %52 = arith.select %49, %47, %51 : vector<32x32xi1>, vector<32x32xf32>
    %53 = arith.truncf %52 : vector<32x32xf32> to vector<32x32xbf16>
    %cst_29 = arith.constant dense<0.000000e+00> : vector<32x32xf32>
    %54 = tpu.matmul %53, %1, %cst_29 {dimension_numbers = #tpu.dot_dimension_numbers<[1], [0], [0], [1], [0, 0, 1, 1], [], []>} : vector<32x32xbf16>, vector<32x32xbf16>, vector<32x32xf32> -> vector<32x32xf32>
    %55 = vector.broadcast %8 : vector<1x32xf32> to vector<32x32xf32>
    %56 = arith.addf %54, %55 : vector<32x32xf32>
    %cst_30 = arith.constant 0.000000e+00 : f32
    %57 = vector.broadcast %cst_30 : f32 to vector<32x32xf32>
    %58 = arith.cmpf ogt, %56, %57 : vector<32x32xf32>
    %cst_31 = arith.constant 1.000000e-01 : f32
    %59 = vector.broadcast %cst_31 : f32 to vector<32x32xf32>
    %60 = arith.mulf %59, %56 : vector<32x32xf32>
    %61 = arith.select %58, %56, %60 : vector<32x32xi1>, vector<32x32xf32>
    %62 = arith.truncf %61 : vector<32x32xf32> to vector<32x32xbf16>
    %cst_32 = arith.constant dense<0.000000e+00> : vector<32x32xf32>
    %63 = tpu.matmul %62, %2, %cst_32 {dimension_numbers = #tpu.dot_dimension_numbers<[1], [0], [0], [1], [0, 0, 1, 1], [], []>} : vector<32x32xbf16>, vector<32x32xbf16>, vector<32x32xf32> -> vector<32x32xf32>
    %64 = vector.broadcast %9 : vector<1x32xf32> to vector<32x32xf32>
    %65 = arith.addf %63, %64 : vector<32x32xf32>
    %cst_33 = arith.constant 0.000000e+00 : f32
    %66 = vector.broadcast %cst_33 : f32 to vector<32x32xf32>
    %67 = arith.cmpf ogt, %65, %66 : vector<32x32xf32>
    %cst_34 = arith.constant 1.000000e-01 : f32
    %68 = vector.broadcast %cst_34 : f32 to vector<32x32xf32>
    %69 = arith.mulf %68, %65 : vector<32x32xf32>
    %70 = arith.select %67, %65, %69 : vector<32x32xi1>, vector<32x32xf32>
    %71 = arith.truncf %41 : vector<32x32xf32> to vector<32x32xbf16>
    %cst_35 = arith.constant dense<0.000000e+00> : vector<32x32xf32>
    %72 = tpu.matmul %71, %3, %cst_35 {dimension_numbers = #tpu.dot_dimension_numbers<[1], [0], [0], [1], [0, 0, 1, 1], [], []>} : vector<32x32xbf16>, vector<32x32xbf16>, vector<32x32xf32> -> vector<32x32xf32>
    %73 = arith.truncf %70 : vector<32x32xf32> to vector<32x32xbf16>
    %cst_36 = arith.constant dense<0.000000e+00> : vector<32x32xf32>
    %74 = tpu.matmul %73, %4, %cst_36 {dimension_numbers = #tpu.dot_dimension_numbers<[1], [0], [0], [1], [0, 0, 1, 1], [], []>} : vector<32x32xbf16>, vector<32x32xbf16>, vector<32x32xf32> -> vector<32x32xf32>
    %75 = arith.addf %72, %74 : vector<32x32xf32>
    %76 = vector.broadcast %10 : vector<1x32xf32> to vector<32x32xf32>
    %77 = arith.addf %75, %76 : vector<32x32xf32>
    %cst_37 = arith.constant 0.000000e+00 : f32
    %78 = vector.broadcast %cst_37 : f32 to vector<32x32xf32>
    %79 = arith.cmpf ogt, %77, %78 : vector<32x32xf32>
    %cst_38 = arith.constant 1.000000e-01 : f32
    %80 = vector.broadcast %cst_38 : f32 to vector<32x32xf32>
    %81 = arith.mulf %80, %77 : vector<32x32xf32>
    %82 = arith.select %79, %77, %81 : vector<32x32xi1>, vector<32x32xf32>
    %83 = arith.truncf %82 : vector<32x32xf32> to vector<32x32xbf16>
    %cst_39 = arith.constant dense<0.000000e+00> : vector<32x32xf32>
    %84 = tpu.matmul %83, %5, %cst_39 {dimension_numbers = #tpu.dot_dimension_numbers<[1], [0], [0], [1], [0, 0, 1, 1], [], []>} : vector<32x32xbf16>, vector<32x32xbf16>, vector<32x32xf32> -> vector<32x32xf32>
    %85 = vector.broadcast %11 : vector<1x32xf32> to vector<32x32xf32>
    %86 = arith.addf %84, %85 : vector<32x32xf32>
    %cst_40 = arith.constant 0.000000e+00 : f32
    %87 = vector.broadcast %cst_40 : f32 to vector<32x32xf32>
    %88 = arith.cmpf ogt, %86, %87 : vector<32x32xf32>
    %cst_41 = arith.constant 1.000000e-01 : f32
    %89 = vector.broadcast %cst_41 : f32 to vector<32x32xf32>
    %90 = arith.mulf %89, %86 : vector<32x32xf32>
    %91 = arith.select %88, %86, %90 : vector<32x32xi1>, vector<32x32xf32>
    %92 = arith.truncf %91 : vector<32x32xf32> to vector<32x32xbf16>
    %cst_42 = arith.constant dense<0.000000e+00> : vector<8x32xf32>
    %93 = tpu.matmul %6, %92, %cst_42 {dimension_numbers = #tpu.dot_dimension_numbers<[1], [1], [0], [0], [0, 0, 1, 0], [], []>} : vector<8x32xbf16>, vector<32x32xbf16>, vector<8x32xf32> -> vector<8x32xf32>
    %94 = vector.extract_strided_slice %93 {offsets = [0, 0], sizes = [1, 32], strides = [1, 1]} : vector<8x32xf32> to vector<1x32xf32>
    %95 = vector.broadcast %12 : vector<1x1xf32> to vector<1x32xf32>
    %96 = arith.addf %94, %95 : vector<1x32xf32>
    %cst_43 = arith.constant 0.000000e+00 : f32
    %97 = vector.broadcast %cst_43 : f32 to vector<1x32xf32>
    %98 = arith.subf %97, %96 : vector<1x32xf32>
    %99 = math.exp %98 : vector<1x32xf32>
    %cst_44 = arith.constant 1.000000e+00 : f32
    %100 = vector.broadcast %cst_44 : f32 to vector<1x32xf32>
    %101 = arith.addf %100, %99 : vector<1x32xf32>
    %cst_45 = arith.constant 1.000000e+00 : f32
    %102 = vector.broadcast %cst_45 : f32 to vector<1x32xf32>
    %103 = arith.divf %102, %101 : vector<1x32xf32>
    %c0_46 = arith.constant 0 : index
    %c0_47 = arith.constant 0 : index
    %104 = vector.load %arg5[%c0_46, %c0_47] : memref<1x32xf32, #tpu.memory_space<vmem>>, vector<1x32xf32>
    tpu.vector_store %arg5[%c0_46, %c0_47], %103 {strides = array<i32>} : memref<1x32xf32, #tpu.memory_space<vmem>>, vector<1x32xf32>,
    return
  }
  func.func @transform_0(%arg0: i32) -> (i32, i32) {
    %c0_i32 = arith.constant 0 : i32
    %c0_i32_0 = arith.constant 0 : i32
    return %arg0, %c0_i32 : i32, i32
  }
  func.func @transform_1(%arg0: i32) -> (i32, i32) {
    %c0_i32 = arith.constant 0 : i32
    %c0_i32_0 = arith.constant 0 : i32
    return %arg0, %c0_i32 : i32, i32
  }
  func.func @transform_2(%arg0: i32) -> (i32, i32) {
    %c0_i32 = arith.constant 0 : i32
    %c0_i32_0 = arith.constant 0 : i32
    %c0_i32_1 = arith.constant 0 : i32
    return %c0_i32, %c0_i32_0 : i32, i32
  }
  func.func @transform_3(%arg0: i32) -> (i32, i32) {
    %c0_i32 = arith.constant 0 : i32
    %c0_i32_0 = arith.constant 0 : i32
    %c0_i32_1 = arith.constant 0 : i32
    return %c0_i32, %c0_i32_0 : i32, i32
  }
  func.func @transform_4(%arg0: i32) -> (i32, i32) {
    %c0_i32 = arith.constant 0 : i32
    %c0_i32_0 = arith.constant 0 : i32
    return %c0_i32, %arg0 : i32, i32
  }
}

</mosaic_0001>

<llo_original>
// kernel: fight_predictor.1
$region0: #{fight_predictor.1}
  #allocation0 [shape = 'u32[]', space=smem, size = 0x4, offset = 0x4, fixed_abs, tag = 'smem constant byte address 0x4 - core index']
  #allocation1 [shape = 'u32[144,128]{1,0:T(1,128)}', space=vmem, size = 0x12000, scoped, tag = 'internal scratch']
  %s0 = inlined_call_operand.vmem [shape: s8[32,71], index: 0, kind: input, shape index: {}]
  %s1 = inlined_call_operand.vmem [shape: s8[32,71], index: 1, kind: input, shape index: {}]
  %s2 = inlined_call_operand.vmem [shape: bf16[296,32], index: 2, kind: input, shape index: {}]
  %s3 = inlined_call_operand.vmem [shape: f32[8,32], index: 3, kind: input, shape index: {}]
  %s4 = inlined_call_operand.hbm [shape: f32[1,32], index: 4, kind: output, shape index: {}]
  %s5 = sld [smem:[#allocation0]]
  $region26: #{fight_predictor.1} parent=0
    _
  %s7 = ssub.s32 1, %s5
  %s8 = scalar_select 0, %s7, %s5
  $region1: #{fight_predictor.1} parent=0
    #allocation2 [shape = 'u8[512]{0}', space=vmem, size = 0x400, scoped, tag = 'output window, operand 0, single buffered']
    #allocation3 [shape = 's32[1]{0}', space=sflag, size = 0x4, scoped, tag = 'scoped memory for fight_predictor.1']
    %9 = vsyncpa [#allocation3], 0
    // Predicated region
    $region2: #{fight_predictor.1} parent=1 // pred_check
      _
    $region3: #{fight_predictor.1} parent=1 // pred_check_branch
      %11 = sbr.rel (0) target = $region5
    $region4: #{fight_predictor.1} parent=1 // pred_region
      _
    $region5: #{fight_predictor.1} parent=1 // pred_fallthru
      _
    // Predicated region
    $region6: #{fight_predictor.1} parent=1 // pred_check
      _
    $region7: #{fight_predictor.1} parent=1 // pred_check_branch
      %13 = sbr.rel (0) target = $region9
    $region8: #{fight_predictor.1} parent=1 // pred_region
      _
    $region9: #{fight_predictor.1} parent=1 // pred_fallthru
      _
    // Predicated region
    $region10: #{fight_predictor.1} parent=1 // pred_check
      _
    $region11: #{fight_predictor.1} parent=1 // pred_check_branch
      %15 = sbr.rel (0) target = $region13
    $region12: #{fight_predictor.1} parent=1 // pred_region
      _
    $region13: #{fight_predictor.1} parent=1 // pred_fallthru
      _
    // Predicated region
    $region14: #{fight_predictor.1} parent=1 // pred_check
      _
    $region15: #{fight_predictor.1} parent=1 // pred_check_branch
      %17 = sbr.rel (0) target = $region17
    $region16: #{fight_predictor.1} parent=1 // pred_region
      _
    $region17: #{fight_predictor.1} parent=1 // pred_fallthru
      _
    %v19 = vld [vmem:[%s2] sm:$0xf]
    %v20 = vld [vmem:[%s2 + $0x4] sm:$0xf]
    %v21 = vld [vmem:[%s2 + $0x8] sm:$0xf]
    %v22 = vld [vmem:[%s2 + $0xc] sm:$0xf]
    %v23 = vld [vmem:[%s2 + $0x10] sm:$0xf]
    %v24 = vld [vmem:[%s2 + $0x14] sm:$0xf]
    %v25 = vld [vmem:[%s2 + $0x18] sm:$0xf]
    %v26 = vld [vmem:[%s2 + $0x1c] sm:$0xf]
    %v27 = vld [vmem:[%s2 + $0x20] sm:$0xf]
    %v28 = vld [vmem:[%s2 + $0x40] sm:$0xf]
    %v29 = vld [vmem:[%s2 + $0x44] sm:$0xf]
    %v30 = vld [vmem:[%s2 + $0x48] sm:$0xf]
    %v31 = vld [vmem:[%s2 + $0x4c] sm:$0xf]
    %v32 = vld [vmem:[%s2 + $0x50] sm:$0xf]
    %v33 = vld [vmem:[%s2 + $0x54] sm:$0xf]
    %v34 = vld [vmem:[%s2 + $0x58] sm:$0xf]
    %v35 = vld [vmem:[%s2 + $0x5c] sm:$0xf]
    %v36 = vld [vmem:[%s2 + $0x60] sm:$0xf]
    %v37 = vld [vmem:[%s2 + $0x64] sm:$0xf]
    %v38 = vld [vmem:[%s2 + $0x68] sm:$0xf]
    %v39 = vld [vmem:[%s2 + $0x6c] sm:$0xf]
    %v40 = vld [vmem:[%s2 + $0x70] sm:$0xf]
    %v41 = vld [vmem:[%s2 + $0x74] sm:$0xf]
    %v42 = vld [vmem:[%s2 + $0x78] sm:$0xf]
    %v43 = vld [vmem:[%s2 + $0x7c] sm:$0xf]
    %v44 = vld [vmem:[%s2 + $0x80] sm:$0xf]
    %v45 = vld [vmem:[%s2 + $0x84] sm:$0xf]
    %v46 = vld [vmem:[%s2 + $0x88] sm:$0xf]
    %v47 = vld [vmem:[%s2 + $0x8c] sm:$0xf]
    %v48 = vld [vmem:[%s2 + $0x90] sm:$0xf]
    %v49 = vld [vmem:[%s3] sm:$0x1]
    %v50 = vld [vmem:[%s3 + $0x1] sm:$0x1]
    %v51 = vld [vmem:[%s3 + $0x2] sm:$0x1]
    %v52 = vld [vmem:[%s3 + $0x3] sm:$0x1]
    %v53 = vld [vmem:[%s3 + $0x4] sm:$0x1]
    %v54 = vld [vmem:[%s3 + $0x5] sm:$0x1]
    %v55 = vld [vmem:[%s0] sm:$0xff]
    %v56 = vunpack.c.l.s8.bf16 %v55
    %v57 = vunpack.c.h.s8.bf16 %v55
    %v58 = vlaneseq
    %v59 = vshrl.u32 %v58, 7
    %v60 = vsub.s32 0, %v59
    %v61 = vrot.slane %v49, %v60
    %v71 = vunpack.c.l.b16 %v19
    %v72 = vunpack.c.l.b16 %v20
    %v73 = vunpack.c.l.b16 %v21
    %v74 = vunpack.c.l.b16 %v22
    %v75 = vunpack.c.l.b16 %v23
    %v76 = vunpack.c.l.b16 %v24
    %v77 = vunpack.c.l.b16 %v25
    %v78 = vunpack.c.l.b16 %v26
    %v79 = vunpack.c.l.b16 %v27
    %v80 = vpack.c.b16 %v72, %v71
    %v81 = vpack.c.b16 %v74, %v73
    %v82 = vpack.c.b16 %v76, %v75
    %v83 = vpack.c.b16 %v78, %v77
    %v84 = vpack.c.b16 %v79, %v79
    %vm89 = vcmask 580608
    %v91 = vsel %vm89, %v56, 0
    %v94 = vsel %vm89, %v57, 0
    %vm96 = vcmask 1042432
    %vm97 = vcmask 1043456
    %v98 = vsel %vm96, 4294967295, 65535
    %v99 = vsel %vm97, %v98, 0
    %v101 = vand.u32 %v84, %v99
    %103 = vmatprep.subr.bf16.mxu0 0
    %104 = vmatpush1.bf16.msra.mxu0 0
    %105 = vmatprep.subr.bf16.mxu0 0
    %106 = vmatpush1.bf16.msra.mxu0 0
    %107 = vmatprep.subr.bf16.mxu0 0
    %108 = vmatpush1.bf16.msra.mxu0 0
    %109 = vmatprep.subr.bf16.mxu0 0
    %110 = vmatpush1.bf16.msra.mxu0 %v101
    %111 = vmatprep.subr.bf16.mxu0 0
    %112 = vmatpush1.bf16.msra.mxu0 %v83
    %113 = vmatprep.subr.bf16.mxu0 0
    %114 = vmatpush1.bf16.msra.mxu0 %v82
    %115 = vmatprep.subr.bf16.mxu0 0
    %116 = vmatpush1.bf16.msra.mxu0 %v81
    %117 = vmatprep.subr.bf16.mxu0 0
    %118 = vmatpush1.bf16.msra.mxu0 %v80
    %119 = vmatprep.subr.bf16.mxu0 0
    %120 = vmatpush2.bf16.msra.mxu0 0
    %121 = vmatprep.subr.bf16.mxu0 0
    %122 = vmatpush2.bf16.msra.mxu0 0
    %123 = vmatprep.subr.bf16.mxu0 0
    %124 = vmatpush2.bf16.msra.mxu0 0
    %125 = vmatprep.subr.bf16.mxu0 0
    %126 = vmatpush2.bf16.msra.mxu0 0
    %127 = vmatprep.subr.bf16.mxu0 0
    %128 = vmatpush2.bf16.msra.mxu0 0
    %129 = vmatprep.subr.bf16.mxu0 0
    %130 = vmatpush2.bf16.msra.mxu0 0
    %131 = vmatprep.subr.bf16.mxu0 0
    %132 = vmatpush2.bf16.msra.mxu0 0
    %133 = vmatprep.subr.bf16.mxu0 0
    %134 = vmatpush2.bf16.msra.mxu0 0
    %135 = vmatprep.mubr.bf16.mxu0 0
    %136 = vmatmul.mubr.bf16.gmra.mxu0 %v91
    %v137 = vpop.f32.mrf.mxu0
    %v138 = vadd.f32 %v61, %v137
    %v139 = vpop.f32.mrf.mxu0
    %v140 = vpop.f32.mrf.mxu0
    %v141 = vadd.f32 %v61, %v140
    %v142 = vpop.f32.mrf.mxu0
    %143 = vmatprep.mubr.bf16.mxu0 0
    %144 = vmatmul.mubr.bf16.gmra.mxu0 %v94
    %v145 = vpop.f32.mrf.mxu0
    %v146 = vadd.f32 %v61, %v145
    %v147 = vpop.f32.mrf.mxu0
    %v148 = vpop.f32.mrf.mxu0
    %v149 = vadd.f32 %v61, %v148
    %v150 = vpop.f32.mrf.mxu0
    %151 = vdwg.mxu0
    %vm152 = vcmp.gt.f32.partialorder %v138, 0.0
    %vm153 = vcmp.gt.f32.partialorder %v141, 0.0
    %vm154 = vcmp.gt.f32.partialorder %v146, 0.0
    %vm155 = vcmp.gt.f32.partialorder %v149, 0.0
    %v156 = vmul.f32 %v138, 0.1
    %v157 = vmul.f32 %v141, 0.1
    %v158 = vmul.f32 %v146, 0.1
    %v159 = vmul.f32 %v149, 0.1
    %v160 = vsel %vm152, %v138, %v156
    %v161 = vsel %vm153, %v141, %v157
    %v162 = vsel %vm154, %v146, %v158
    %v163 = vsel %vm155, %v149, %v159
    %v164 = vpack.c.bf16 %v161, %v160
    %v165 = vpack.c.bf16 %v163, %v162
    %v166 = vlaneseq
    %v167 = vshrl.u32 %v166, 7
    %v168 = vsub.s32 0, %v167
    %v169 = vrot.slane %v50, %v168
    %v174 = vunpack.c.l.b16 %v28
    %v175 = vunpack.c.l.b16 %v29
    %v176 = vunpack.c.l.b16 %v30
    %v177 = vunpack.c.l.b16 %v31
    %v178 = vpack.c.b16 %v175, %v174
    %v179 = vpack.c.b16 %v177, %v176
    %vm182 = vcmask 261120
    %v184 = vsel %vm182, %v164, 0
    %v187 = vsel %vm182, %v165, 0
    %189 = vmatprep.subr.bf16.mxu0 0
    %190 = vmatpush1.bf16.msra.mxu0 0
    %191 = vmatprep.subr.bf16.mxu0 0
    %192 = vmatpush1.bf16.msra.mxu0 0
    %193 = vmatprep.subr.bf16.mxu0 0
    %194 = vmatpush1.bf16.msra.mxu0 0
    %195 = vmatprep.subr.bf16.mxu0 0
    %196 = vmatpush1.bf16.msra.mxu0 0
    %197 = vmatprep.subr.bf16.mxu0 0
    %198 = vmatpush1.bf16.msra.mxu0 0
    %199 = vmatprep.subr.bf16.mxu0 0
    %200 = vmatpush1.bf16.msra.mxu0 0
    %201 = vmatprep.subr.bf16.mxu0 0
    %202 = vmatpush1.bf16.msra.mxu0 %v179
    %203 = vmatprep.subr.bf16.mxu0 0
    %204 = vmatpush1.bf16.msra.mxu0 %v178
    %205 = vmatprep.subr.bf16.mxu0 0
    %206 = vmatpush2.bf16.msra.mxu0 0
    %207 = vmatprep.subr.bf16.mxu0 0
    %208 = vmatpush2.bf16.msra.mxu0 0
    %209 = vmatprep.subr.bf16.mxu0 0
    %210 = vmatpush2.bf16.msra.mxu0 0
    %211 = vmatprep.subr.bf16.mxu0 0
    %212 = vmatpush2.bf16.msra.mxu0 0
    %213 = vmatprep.subr.bf16.mxu0 0
    %214 = vmatpush2.bf16.msra.mxu0 0
    %215 = vmatprep.subr.bf16.mxu0 0
    %216 = vmatpush2.bf16.msra.mxu0 0
    %217 = vmatprep.subr.bf16.mxu0 0
    %218 = vmatpush2.bf16.msra.mxu0 0
    %219 = vmatprep.subr.bf16.mxu0 0
    %220 = vmatpush2.bf16.msra.mxu0 0
    %221 = vmatprep.mubr.bf16.mxu0 0
    %222 = vmatmul.mubr.bf16.gmra.mxu0 %v184
    %v223 = vpop.f32.mrf.mxu0
    %v224 = vadd.f32 %v169, %v223
    %v225 = vpop.f32.mrf.mxu0
    %v226 = vpop.f32.mrf.mxu0
    %v227 = vadd.f32 %v169, %v226
    %v228 = vpop.f32.mrf.mxu0
    %229 = vmatprep.mubr.bf16.mxu0 0
    %230 = vmatmul.mubr.bf16.gmra.mxu0 %v187
    %v231 = vpop.f32.mrf.mxu0
    %v232 = vadd.f32 %v169, %v231
    %v233 = vpop.f32.mrf.mxu0
    %v234 = vpop.f32.mrf.mxu0
    %v235 = vadd.f32 %v169, %v234
    %v236 = vpop.f32.mrf.mxu0
    %237 = vdwg.mxu0
    %vm238 = vcmp.gt.f32.partialorder %v224, 0.0
    %vm239 = vcmp.gt.f32.partialorder %v227, 0.0
    %vm240 = vcmp.gt.f32.partialorder %v232, 0.0
    %vm241 = vcmp.gt.f32.partialorder %v235, 0.0
    %v242 = vmul.f32 %v224, 0.1
    %v243 = vmul.f32 %v227, 0.1
    %v244 = vmul.f32 %v232, 0.1
    %v245 = vmul.f32 %v235, 0.1
    %v246 = vsel %vm238, %v224, %v242
    %v247 = vsel %vm239, %v227, %v243
    %v248 = vsel %vm240, %v232, %v244
    %v249 = vsel %vm241, %v235, %v245
    %v250 = vpack.c.bf16 %v247, %v246
    %v251 = vpack.c.bf16 %v249, %v248
    %v252 = vlaneseq
    %v253 = vshrl.u32 %v252, 7
    %v254 = vsub.s32 0, %v253
    %v255 = vrot.slane %v51, %v254
    %v260 = vunpack.c.l.b16 %v32
    %v261 = vunpack.c.l.b16 %v33
    %v262 = vunpack.c.l.b16 %v34
    %v263 = vunpack.c.l.b16 %v35
    %v264 = vpack.c.b16 %v261, %v260
    %v265 = vpack.c.b16 %v263, %v262
    %v269 = vsel %vm182, %v250, 0
    %v272 = vsel %vm182, %v251, 0
    %274 = vmatprep.subr.bf16.mxu0 0
    %275 = vmatpush1.bf16.msra.mxu0 0
    %276 = vmatprep.subr.bf16.mxu0 0
    %277 = vmatpush1.bf16.msra.mxu0 0
    %278 = vmatprep.subr.bf16.mxu0 0
    %279 = vmatpush1.bf16.msra.mxu0 0
    %280 = vmatprep.subr.bf16.mxu0 0
    %281 = vmatpush1.bf16.msra.mxu0 0
    %282 = vmatprep.subr.bf16.mxu0 0
    %283 = vmatpush1.bf16.msra.mxu0 0
    %284 = vmatprep.subr.bf16.mxu0 0
    %285 = vmatpush1.bf16.msra.mxu0 0
    %286 = vmatprep.subr.bf16.mxu0 0
    %287 = vmatpush1.bf16.msra.mxu0 %v265
    %288 = vmatprep.subr.bf16.mxu0 0
    %289 = vmatpush1.bf16.msra.mxu0 %v264
    %290 = vmatprep.subr.bf16.mxu0 0
    %291 = vmatpush2.bf16.msra.mxu0 0
    %292 = vmatprep.subr.bf16.mxu0 0
    %293 = vmatpush2.bf16.msra.mxu0 0
    %294 = vmatprep.subr.bf16.mxu0 0
    %295 = vmatpush2.bf16.msra.mxu0 0
    %296 = vmatprep.subr.bf16.mxu0 0
    %297 = vmatpush2.bf16.msra.mxu0 0
    %298 = vmatprep.subr.bf16.mxu0 0
    %299 = vmatpush2.bf16.msra.mxu0 0
    %300 = vmatprep.subr.bf16.mxu0 0
    %301 = vmatpush2.bf16.msra.mxu0 0
    %302 = vmatprep.subr.bf16.mxu0 0
    %303 = vmatpush2.bf16.msra.mxu0 0
    %304 = vmatprep.subr.bf16.mxu0 0
    %305 = vmatpush2.bf16.msra.mxu0 0
    %306 = vmatprep.mubr.bf16.mxu0 0
    %307 = vmatmul.mubr.bf16.gmra.mxu0 %v269
    %v308 = vpop.f32.mrf.mxu0
    %v309 = vadd.f32 %v255, %v308
    %v310 = vpop.f32.mrf.mxu0
    %v311 = vpop.f32.mrf.mxu0
    %v312 = vadd.f32 %v255, %v311
    %v313 = vpop.f32.mrf.mxu0
    %314 = vmatprep.mubr.bf16.mxu0 0
    %315 = vmatmul.mubr.bf16.gmra.mxu0 %v272
    %v316 = vpop.f32.mrf.mxu0
    %v317 = vadd.f32 %v255, %v316
    %v318 = vpop.f32.mrf.mxu0
    %v319 = vpop.f32.mrf.mxu0
    %v320 = vadd.f32 %v255, %v319
    %v321 = vpop.f32.mrf.mxu0
    %322 = vdwg.mxu0
    %vm323 = vcmp.gt.f32.partialorder %v309, 0.0
    %vm324 = vcmp.gt.f32.partialorder %v312, 0.0
    %vm325 = vcmp.gt.f32.partialorder %v317, 0.0
    %vm326 = vcmp.gt.f32.partialorder %v320, 0.0
    %v327 = vmul.f32 %v309, 0.1
    %v328 = vmul.f32 %v312, 0.1
    %v329 = vmul.f32 %v317, 0.1
    %v330 = vmul.f32 %v320, 0.1
    %v331 = vsel %vm323, %v309, %v327
    %v332 = vsel %vm324, %v312, %v328
    %v333 = vsel %vm325, %v317, %v329
    %v334 = vsel %vm326, %v320, %v330
    %v335 = vld [vmem:[%s1] sm:$0xff]
    %v336 = vunpack.c.l.s8.bf16 %v335
    %v337 = vunpack.c.h.s8.bf16 %v335
    %v339 = vsel %vm89, %v336, 0
    %v342 = vsel %vm89, %v337, 0
    %344 = vmatprep.subr.bf16.mxu0 0
    %345 = vmatpush1.bf16.msra.mxu0 0
    %346 = vmatprep.subr.bf16.mxu0 0
    %347 = vmatpush1.bf16.msra.mxu0 0
    %348 = vmatprep.subr.bf16.mxu0 0
    %349 = vmatpush1.bf16.msra.mxu0 0
    %350 = vmatprep.subr.bf16.mxu0 0
    %351 = vmatpush1.bf16.msra.mxu0 %v101
    %352 = vmatprep.subr.bf16.mxu0 0
    %353 = vmatpush1.bf16.msra.mxu0 %v83
    %354 = vmatprep.subr.bf16.mxu0 0
    %355 = vmatpush1.bf16.msra.mxu0 %v82
    %356 = vmatprep.subr.bf16.mxu0 0
    %357 = vmatpush1.bf16.msra.mxu0 %v81
    %358 = vmatprep.subr.bf16.mxu0 0
    %359 = vmatpush1.bf16.msra.mxu0 %v80
    %360 = vmatprep.subr.bf16.mxu0 0
    %361 = vmatpush2.bf16.msra.mxu0 0
    %362 = vmatprep.subr.bf16.mxu0 0
    %363 = vmatpush2.bf16.msra.mxu0 0
    %364 = vmatprep.subr.bf16.mxu0 0
    %365 = vmatpush2.bf16.msra.mxu0 0
    %366 = vmatprep.subr.bf16.mxu0 0
    %367 = vmatpush2.bf16.msra.mxu0 0
    %368 = vmatprep.subr.bf16.mxu0 0
    %369 = vmatpush2.bf16.msra.mxu0 0
    %370 = vmatprep.subr.bf16.mxu0 0
    %371 = vmatpush2.bf16.msra.mxu0 0
    %372 = vmatprep.subr.bf16.mxu0 0
    %373 = vmatpush2.bf16.msra.mxu0 0
    %374 = vmatprep.subr.bf16.mxu0 0
    %375 = vmatpush2.bf16.msra.mxu0 0
    %376 = vmatprep.mubr.bf16.mxu0 0
    %377 = vmatmul.mubr.bf16.gmra.mxu0 %v339
    %v378 = vpop.f32.mrf.mxu0
    %v379 = vadd.f32 %v61, %v378
    %v380 = vpop.f32.mrf.mxu0
    %v381 = vpop.f32.mrf.mxu0
    %v382 = vadd.f32 %v61, %v381
    %v383 = vpop.f32.mrf.mxu0
    %384 = vmatprep.mubr.bf16.mxu0 0
    %385 = vmatmul.mubr.bf16.gmra.mxu0 %v342
    %v386 = vpop.f32.mrf.mxu0
    %v387 = vadd.f32 %v61, %v386
    %v388 = vpop.f32.mrf.mxu0
    %v389 = vpop.f32.mrf.mxu0
    %v390 = vadd.f32 %v61, %v389
    %v391 = vpop.f32.mrf.mxu0
    %392 = vdwg.mxu0
    %vm393 = vcmp.gt.f32.partialorder %v379, 0.0
    %vm394 = vcmp.gt.f32.partialorder %v382, 0.0
    %vm395 = vcmp.gt.f32.partialorder %v387, 0.0
    %vm396 = vcmp.gt.f32.partialorder %v390, 0.0
    %v397 = vmul.f32 %v379, 0.1
    %v398 = vmul.f32 %v382, 0.1
    %v399 = vmul.f32 %v387, 0.1
    %v400 = vmul.f32 %v390, 0.1
    %v401 = vsel %vm393, %v379, %v397
    %v402 = vsel %vm394, %v382, %v398
    %v403 = vsel %vm395, %v387, %v399
    %v404 = vsel %vm396, %v390, %v400
    %v405 = vpack.c.bf16 %v402, %v401
    %v406 = vpack.c.bf16 %v404, %v403
    %v408 = vsel %vm182, %v405, 0
    %v411 = vsel %vm182, %v406, 0
    %413 = vmatprep.subr.bf16.mxu0 0
    %414 = vmatpush1.bf16.msra.mxu0 0
    %415 = vmatprep.subr.bf16.mxu0 0
    %416 = vmatpush1.bf16.msra.mxu0 0
    %417 = vmatprep.subr.bf16.mxu0 0
    %418 = vmatpush1.bf16.msra.mxu0 0
    %419 = vmatprep.subr.bf16.mxu0 0
    %420 = vmatpush1.bf16.msra.mxu0 0
    %421 = vmatprep.subr.bf16.mxu0 0
    %422 = vmatpush1.bf16.msra.mxu0 0
    %423 = vmatprep.subr.bf16.mxu0 0
    %424 = vmatpush1.bf16.msra.mxu0 0
    %425 = vmatprep.subr.bf16.mxu0 0
    %426 = vmatpush1.bf16.msra.mxu0 %v179
    %427 = vmatprep.subr.bf16.mxu0 0
    %428 = vmatpush1.bf16.msra.mxu0 %v178
    %429 = vmatprep.subr.bf16.mxu0 0
    %430 = vmatpush2.bf16.msra.mxu0 0
    %431 = vmatprep.subr.bf16.mxu0 0
    %432 = vmatpush2.bf16.msra.mxu0 0
    %433 = vmatprep.subr.bf16.mxu0 0
    %434 = vmatpush2.bf16.msra.mxu0 0
    %435 = vmatprep.subr.bf16.mxu0 0
    %436 = vmatpush2.bf16.msra.mxu0 0
    %437 = vmatprep.subr.bf16.mxu0 0
    %438 = vmatpush2.bf16.msra.mxu0 0
    %439 = vmatprep.subr.bf16.mxu0 0
    %440 = vmatpush2.bf16.msra.mxu0 0
    %441 = vmatprep.subr.bf16.mxu0 0
    %442 = vmatpush2.bf16.msra.mxu0 0
    %443 = vmatprep.subr.bf16.mxu0 0
    %444 = vmatpush2.bf16.msra.mxu0 0
    %445 = vmatprep.mubr.bf16.mxu0 0
    %446 = vmatmul.mubr.bf16.gmra.mxu0 %v408
    %v447 = vpop.f32.mrf.mxu0
    %v448 = vadd.f32 %v169, %v447
    %v449 = vpop.f32.mrf.mxu0
    %v450 = vpop.f32.mrf.mxu0
    %v451 = vadd.f32 %v169, %v450
    %v452 = vpop.f32.mrf.mxu0
    %453 = vmatprep.mubr.bf16.mxu0 0
    %454 = vmatmul.mubr.bf16.gmra.mxu0 %v411
    %v455 = vpop.f32.mrf.mxu0
    %v456 = vadd.f32 %v169, %v455
    %v457 = vpop.f32.mrf.mxu0
    %v458 = vpop.f32.mrf.mxu0
    %v459 = vadd.f32 %v169, %v458
    %v460 = vpop.f32.mrf.mxu0
    %461 = vdwg.mxu0
    %vm462 = vcmp.gt.f32.partialorder %v448, 0.0
    %vm463 = vcmp.gt.f32.partialorder %v451, 0.0
    %vm464 = vcmp.gt.f32.partialorder %v456, 0.0
    %vm465 = vcmp.gt.f32.partialorder %v459, 0.0
    %v466 = vmul.f32 %v448, 0.1
    %v467 = vmul.f32 %v451, 0.1
    %v468 = vmul.f32 %v456, 0.1
    %v469 = vmul.f32 %v459, 0.1
    %v470 = vsel %vm462, %v448, %v466
    %v471 = vsel %vm463, %v451, %v467
    %v472 = vsel %vm464, %v456, %v468
    %v473 = vsel %vm465, %v459, %v469
    %v474 = vpack.c.bf16 %v471, %v470
    %v475 = vpack.c.bf16 %v473, %v472
    %v477 = vsel %vm182, %v474, 0
    %v480 = vsel %vm182, %v475, 0
    %482 = vmatprep.subr.bf16.mxu0 0
    %483 = vmatpush1.bf16.msra.mxu0 0
    %484 = vmatprep.subr.bf16.mxu0 0
    %485 = vmatpush1.bf16.msra.mxu0 0
    %486 = vmatprep.subr.bf16.mxu0 0
    %487 = vmatpush1.bf16.msra.mxu0 0
    %488 = vmatprep.subr.bf16.mxu0 0
    %489 = vmatpush1.bf16.msra.mxu0 0
    %490 = vmatprep.subr.bf16.mxu0 0
    %491 = vmatpush1.bf16.msra.mxu0 0
    %492 = vmatprep.subr.bf16.mxu0 0
    %493 = vmatpush1.bf16.msra.mxu0 0
    %494 = vmatprep.subr.bf16.mxu0 0
    %495 = vmatpush1.bf16.msra.mxu0 %v265
    %496 = vmatprep.subr.bf16.mxu0 0
    %497 = vmatpush1.bf16.msra.mxu0 %v264
    %498 = vmatprep.subr.bf16.mxu0 0
    %499 = vmatpush2.bf16.msra.mxu0 0
    %500 = vmatprep.subr.bf16.mxu0 0
    %501 = vmatpush2.bf16.msra.mxu0 0
    %502 = vmatprep.subr.bf16.mxu0 0
    %503 = vmatpush2.bf16.msra.mxu0 0
    %504 = vmatprep.subr.bf16.mxu0 0
    %505 = vmatpush2.bf16.msra.mxu0 0
    %506 = vmatprep.subr.bf16.mxu0 0
    %507 = vmatpush2.bf16.msra.mxu0 0
    %508 = vmatprep.subr.bf16.mxu0 0
    %509 = vmatpush2.bf16.msra.mxu0 0
    %510 = vmatprep.subr.bf16.mxu0 0
    %511 = vmatpush2.bf16.msra.mxu0 0
    %512 = vmatprep.subr.bf16.mxu0 0
    %513 = vmatpush2.bf16.msra.mxu0 0
    %514 = vmatprep.mubr.bf16.mxu0 0
    %515 = vmatmul.mubr.bf16.gmra.mxu0 %v477
    %v516 = vpop.f32.mrf.mxu0
    %v517 = vadd.f32 %v255, %v516
    %v518 = vpop.f32.mrf.mxu0
    %v519 = vpop.f32.mrf.mxu0
    %v520 = vadd.f32 %v255, %v519
    %v521 = vpop.f32.mrf.mxu0
    %522 = vmatprep.mubr.bf16.mxu0 0
    %523 = vmatmul.mubr.bf16.gmra.mxu0 %v480
    %v524 = vpop.f32.mrf.mxu0
    %v525 = vadd.f32 %v255, %v524
    %v526 = vpop.f32.mrf.mxu0
    %v527 = vpop.f32.mrf.mxu0
    %v528 = vadd.f32 %v255, %v527
    %v529 = vpop.f32.mrf.mxu0
    %530 = vdwg.mxu0
    %vm531 = vcmp.gt.f32.partialorder %v517, 0.0
    %vm532 = vcmp.gt.f32.partialorder %v520, 0.0
    %vm533 = vcmp.gt.f32.partialorder %v525, 0.0
    %vm534 = vcmp.gt.f32.partialorder %v528, 0.0
    %v535 = vmul.f32 %v517, 0.1
    %v536 = vmul.f32 %v520, 0.1
    %v537 = vmul.f32 %v525, 0.1
    %v538 = vmul.f32 %v528, 0.1
    %v539 = vsel %vm531, %v517, %v535
    %v540 = vsel %vm532, %v520, %v536
    %v541 = vsel %vm533, %v525, %v537
    %v542 = vsel %vm534, %v528, %v538
    %v543 = vpack.c.bf16 %v332, %v331
    %v544 = vpack.c.bf16 %v334, %v333
    %v545 = vpack.c.bf16 %v540, %v539
    %v546 = vpack.c.bf16 %v542, %v541
    %v551 = vunpack.c.l.b16 %v40
    %v552 = vunpack.c.l.b16 %v41
    %v553 = vunpack.c.l.b16 %v42
    %v554 = vunpack.c.l.b16 %v43
    %v555 = vpack.c.b16 %v552, %v551
    %v556 = vpack.c.b16 %v554, %v553
    %v560 = vsel %vm182, %v545, 0
    %v563 = vsel %vm182, %v546, 0
    %565 = vmatprep.subr.bf16.mxu0 0
    %566 = vmatpush1.bf16.msra.mxu0 0
    %567 = vmatprep.subr.bf16.mxu0 0
    %568 = vmatpush1.bf16.msra.mxu0 0
    %569 = vmatprep.subr.bf16.mxu0 0
    %570 = vmatpush1.bf16.msra.mxu0 0
    %571 = vmatprep.subr.bf16.mxu0 0
    %572 = vmatpush1.bf16.msra.mxu0 0
    %573 = vmatprep.subr.bf16.mxu0 0
    %574 = vmatpush1.bf16.msra.mxu0 0
    %575 = vmatprep.subr.bf16.mxu0 0
    %576 = vmatpush1.bf16.msra.mxu0 0
    %577 = vmatprep.subr.bf16.mxu0 0
    %578 = vmatpush1.bf16.msra.mxu0 %v556
    %579 = vmatprep.subr.bf16.mxu0 0
    %580 = vmatpush1.bf16.msra.mxu0 %v555
    %581 = vmatprep.subr.bf16.mxu0 0
    %582 = vmatpush2.bf16.msra.mxu0 0
    %583 = vmatprep.subr.bf16.mxu0 0
    %584 = vmatpush2.bf16.msra.mxu0 0
    %585 = vmatprep.subr.bf16.mxu0 0
    %586 = vmatpush2.bf16.msra.mxu0 0
    %587 = vmatprep.subr.bf16.mxu0 0
    %588 = vmatpush2.bf16.msra.mxu0 0
    %589 = vmatprep.subr.bf16.mxu0 0
    %590 = vmatpush2.bf16.msra.mxu0 0
    %591 = vmatprep.subr.bf16.mxu0 0
    %592 = vmatpush2.bf16.msra.mxu0 0
    %593 = vmatprep.subr.bf16.mxu0 0
    %594 = vmatpush2.bf16.msra.mxu0 0
    %595 = vmatprep.subr.bf16.mxu0 0
    %596 = vmatpush2.bf16.msra.mxu0 0
    %597 = vmatprep.mubr.bf16.mxu0 0
    %598 = vmatmul.mubr.bf16.gmra.mxu0 %v560
    %v599 = vpop.f32.mrf.mxu0
    %v600 = vadd.f32 0.0, %v599
    %v601 = vpop.f32.mrf.mxu0
    %v602 = vpop.f32.mrf.mxu0
    %v603 = vadd.f32 0.0, %v602
    %v604 = vpop.f32.mrf.mxu0
    %605 = vmatprep.mubr.bf16.mxu0 0
    %606 = vmatmul.mubr.bf16.gmra.mxu0 %v563
    %v607 = vpop.f32.mrf.mxu0
    %v608 = vadd.f32 0.0, %v607
    %v609 = vpop.f32.mrf.mxu0
    %v610 = vpop.f32.mrf.mxu0
    %v611 = vadd.f32 0.0, %v610
    %v612 = vpop.f32.mrf.mxu0
    %613 = vdwg.mxu0
    %v618 = vunpack.c.l.b16 %v36
    %v619 = vunpack.c.l.b16 %v37
    %v620 = vunpack.c.l.b16 %v38
    %v621 = vunpack.c.l.b16 %v39
    %v622 = vpack.c.b16 %v619, %v618
    %v623 = vpack.c.b16 %v621, %v620
    %v627 = vsel %vm182, %v543, 0
    %v630 = vsel %vm182, %v544, 0
    %632 = vmatprep.subr.bf16.mxu0 0
    %633 = vmatpush1.bf16.msra.mxu0 0
    %634 = vmatprep.subr.bf16.mxu0 0
    %635 = vmatpush1.bf16.msra.mxu0 0
    %636 = vmatprep.subr.bf16.mxu0 0
    %637 = vmatpush1.bf16.msra.mxu0 0
    %638 = vmatprep.subr.bf16.mxu0 0
    %639 = vmatpush1.bf16.msra.mxu0 0
    %640 = vmatprep.subr.bf16.mxu0 0
    %641 = vmatpush1.bf16.msra.mxu0 0
    %642 = vmatprep.subr.bf16.mxu0 0
    %643 = vmatpush1.bf16.msra.mxu0 0
    %644 = vmatprep.subr.bf16.mxu0 0
    %645 = vmatpush1.bf16.msra.mxu0 %v623
    %646 = vmatprep.subr.bf16.mxu0 0
    %647 = vmatpush1.bf16.msra.mxu0 %v622
    %648 = vmatprep.subr.bf16.mxu0 0
    %649 = vmatpush2.bf16.msra.mxu0 0
    %650 = vmatprep.subr.bf16.mxu0 0
    %651 = vmatpush2.bf16.msra.mxu0 0
    %652 = vmatprep.subr.bf16.mxu0 0
    %653 = vmatpush2.bf16.msra.mxu0 0
    %654 = vmatprep.subr.bf16.mxu0 0
    %655 = vmatpush2.bf16.msra.mxu0 0
    %656 = vmatprep.subr.bf16.mxu0 0
    %657 = vmatpush2.bf16.msra.mxu0 0
    %658 = vmatprep.subr.bf16.mxu0 0
    %659 = vmatpush2.bf16.msra.mxu0 0
    %660 = vmatprep.subr.bf16.mxu0 0
    %661 = vmatpush2.bf16.msra.mxu0 0
    %662 = vmatprep.subr.bf16.mxu0 0
    %663 = vmatpush2.bf16.msra.mxu0 0
    %664 = vmatprep.mubr.bf16.mxu0 0
    %665 = vmatmul.mubr.bf16.gmra.mxu0 %v627
    %v666 = vpop.f32.mrf.mxu0
    %v667 = vadd.f32 %v600, %v666
    %v668 = vpop.f32.mrf.mxu0
    %v669 = vpop.f32.mrf.mxu0
    %v670 = vadd.f32 %v603, %v669
    %v671 = vpop.f32.mrf.mxu0
    %672 = vmatprep.mubr.bf16.mxu0 0
    %673 = vmatmul.mubr.bf16.gmra.mxu0 %v630
    %v674 = vpop.f32.mrf.mxu0
    %v675 = vadd.f32 %v608, %v674
    %v676 = vpop.f32.mrf.mxu0
    %v677 = vpop.f32.mrf.mxu0
    %v678 = vadd.f32 %v611, %v677
    %v679 = vpop.f32.mrf.mxu0
    %680 = vdwg.mxu0
    %v681 = vlaneseq
    %v682 = vshrl.u32 %v681, 7
    %v683 = vsub.s32 0, %v682
    %v684 = vrot.slane %v52, %v683
    %v685 = vadd.f32 %v667, %v684
    %v686 = vadd.f32 %v670, %v684
    %v687 = vadd.f32 %v675, %v684
    %v688 = vadd.f32 %v678, %v684
    %vm689 = vcmp.gt.f32.partialorder %v685, 0.0
    %vm690 = vcmp.gt.f32.partialorder %v686, 0.0
    %vm691 = vcmp.gt.f32.partialorder %v687, 0.0
    %vm692 = vcmp.gt.f32.partialorder %v688, 0.0
    %v693 = vmul.f32 %v685, 0.1
    %v694 = vmul.f32 %v686, 0.1
    %v695 = vmul.f32 %v687, 0.1
    %v696 = vmul.f32 %v688, 0.1
    %v697 = vsel %vm689, %v685, %v693
    %v698 = vsel %vm690, %v686, %v694
    %v699 = vsel %vm691, %v687, %v695
    %v700 = vsel %vm692, %v688, %v696
    %v701 = vpack.c.bf16 %v698, %v697
    %v702 = vpack.c.bf16 %v700, %v699
    %v703 = vlaneseq
    %v704 = vshrl.u32 %v703, 7
    %v705 = vsub.s32 0, %v704
    %v706 = vrot.slane %v53, %v705
    %v711 = vunpack.c.l.b16 %v44
    %v712 = vunpack.c.l.b16 %v45
    %v713 = vunpack.c.l.b16 %v46
    %v714 = vunpack.c.l.b16 %v47
    %v715 = vpack.c.b16 %v712, %v711
    %v716 = vpack.c.b16 %v714, %v713
    %v720 = vsel %vm182, %v701, 0
    %v723 = vsel %vm182, %v702, 0
    %725 = vmatprep.subr.bf16.mxu0 0
    %726 = vmatpush1.bf16.msra.mxu0 0
    %727 = vmatprep.subr.bf16.mxu0 0
    %728 = vmatpush1.bf16.msra.mxu0 0
    %729 = vmatprep.subr.bf16.mxu0 0
    %730 = vmatpush1.bf16.msra.mxu0 0
    %731 = vmatprep.subr.bf16.mxu0 0
    %732 = vmatpush1.bf16.msra.mxu0 0
    %733 = vmatprep.subr.bf16.mxu0 0
    %734 = vmatpush1.bf16.msra.mxu0 0
    %735 = vmatprep.subr.bf16.mxu0 0
    %736 = vmatpush1.bf16.msra.mxu0 0
    %737 = vmatprep.subr.bf16.mxu0 0
    %738 = vmatpush1.bf16.msra.mxu0 %v716
    %739 = vmatprep.subr.bf16.mxu0 0
    %740 = vmatpush1.bf16.msra.mxu0 %v715
    %741 = vmatprep.subr.bf16.mxu0 0
    %742 = vmatpush2.bf16.msra.mxu0 0
    %743 = vmatprep.subr.bf16.mxu0 0
    %744 = vmatpush2.bf16.msra.mxu0 0
    %745 = vmatprep.subr.bf16.mxu0 0
    %746 = vmatpush2.bf16.msra.mxu0 0
    %747 = vmatprep.subr.bf16.mxu0 0
    %748 = vmatpush2.bf16.msra.mxu0 0
    %749 = vmatprep.subr.bf16.mxu0 0
    %750 = vmatpush2.bf16.msra.mxu0 0
    %751 = vmatprep.subr.bf16.mxu0 0
    %752 = vmatpush2.bf16.msra.mxu0 0
    %753 = vmatprep.subr.bf16.mxu0 0
    %754 = vmatpush2.bf16.msra.mxu0 0
    %755 = vmatprep.subr.bf16.mxu0 0
    %756 = vmatpush2.bf16.msra.mxu0 0
    %757 = vmatprep.mubr.bf16.mxu0 0
    %758 = vmatmul.mubr.bf16.gmra.mxu0 %v720
    %v759 = vpop.f32.mrf.mxu0
    %v760 = vadd.f32 %v706, %v759
    %v761 = vpop.f32.mrf.mxu0
    %v762 = vpop.f32.mrf.mxu0
    %v763 = vadd.f32 %v706, %v762
    %v764 = vpop.f32.mrf.mxu0
    %765 = vmatprep.mubr.bf16.mxu0 0
    %766 = vmatmul.mubr.bf16.gmra.mxu0 %v723
    %v767 = vpop.f32.mrf.mxu0
    %v768 = vadd.f32 %v706, %v767
    %v769 = vpop.f32.mrf.mxu0
    %v770 = vpop.f32.mrf.mxu0
    %v771 = vadd.f32 %v706, %v770
    %v772 = vpop.f32.mrf.mxu0
    %773 = vdwg.mxu0
    %vm774 = vcmp.gt.f32.partialorder %v760, 0.0
    %vm775 = vcmp.gt.f32.partialorder %v763, 0.0
    %vm776 = vcmp.gt.f32.partialorder %v768, 0.0
    %vm777 = vcmp.gt.f32.partialorder %v771, 0.0
    %v778 = vmul.f32 %v760, 0.1
    %v779 = vmul.f32 %v763, 0.1
    %v780 = vmul.f32 %v768, 0.1
    %v781 = vmul.f32 %v771, 0.1
    %v782 = vsel %vm774, %v760, %v778
    %v783 = vsel %vm775, %v763, %v779
    %v784 = vsel %vm776, %v768, %v780
    %v785 = vsel %vm777, %v771, %v781
    %v786 = vpack.c.bf16 %v783, %v782
    %v787 = vpack.c.bf16 %v785, %v784
    %v789 = vsel %vm182, %v48, 0
    %v792 = vsel %vm182, %v786, 0
    %v795 = vsel %vm182, %v787, 0
    %797 = vmatprep.subr.bf16.mxu0 0
    %798 = vmatpush1.bf16.xpose.msra.mxu0 0
    %799 = vmatprep.subr.bf16.mxu0 0
    %800 = vmatpush1.bf16.xpose.msra.mxu0 0
    %801 = vmatprep.subr.bf16.mxu0 0
    %802 = vmatpush1.bf16.xpose.msra.mxu0 0
    %803 = vmatprep.subr.bf16.mxu0 0
    %804 = vmatpush1.bf16.xpose.msra.mxu0 0
    %805 = vmatprep.subr.bf16.mxu0 0
    %806 = vmatpush1.bf16.xpose.msra.mxu0 0
    %807 = vmatprep.subr.bf16.mxu0 0
    %808 = vmatpush1.bf16.xpose.msra.mxu0 0
    %809 = vmatprep.subr.bf16.mxu0 0
    %810 = vmatpush1.bf16.xpose.msra.mxu0 %v795
    %811 = vmatprep.subr.bf16.mxu0 0
    %812 = vmatpush1.bf16.xpose.msra.mxu0 %v792
    %813 = vmatprep.subr.bf16.mxu0 0
    %814 = vmatpush2.bf16.xpose.msra.mxu0 0
    %815 = vmatprep.subr.bf16.mxu0 0
    %816 = vmatpush2.bf16.xpose.msra.mxu0 0
    %817 = vmatprep.subr.bf16.mxu0 0
    %818 = vmatpush2.bf16.xpose.msra.mxu0 0
    %819 = vmatprep.subr.bf16.mxu0 0
    %820 = vmatpush2.bf16.xpose.msra.mxu0 0
    %821 = vmatprep.subr.bf16.mxu0 0
    %822 = vmatpush2.bf16.xpose.msra.mxu0 0
    %823 = vmatprep.subr.bf16.mxu0 0
    %824 = vmatpush2.bf16.xpose.msra.mxu0 0
    %825 = vmatprep.subr.bf16.mxu0 0
    %826 = vmatpush2.bf16.xpose.msra.mxu0 0
    %827 = vmatprep.subr.bf16.mxu0 0
    %828 = vmatpush2.bf16.xpose.msra.mxu0 0
    %829 = vmatprep.mubr.bf16.mxu0 0
    %830 = vmatmul.mubr.bf16.gmra.mxu0 %v789
    %v831 = vpop.f32.mrf.mxu0
    %v832 = vadd.f32 0.0, %v831
    %v833 = vpop.f32.mrf.mxu0
    %v834 = vpop.f32.mrf.mxu0
    %v835 = vpop.f32.mrf.mxu0
    %836 = vdwg.mxu0
    %838 = vset.pattern.permute.xlu0 0
    %839 = vperm.xlu0 %838, %v54
    %v840 = vpop.permute.xlu0 %839
    %v842 = vadd.f32 %v832, %v840
    %v843 = vsub.f32 0.0, %v842
    %v844 = vmul.f32 %v843, 1.442695
    %v845 = vpow.pop %v844
    %v846 = vadd.f32 %v845, 1.0
    %v847 = vrcp.pop %v846
    %v848 = vmul.f32 1.0, %v847
    %vm849 = vcmask 253952
    %850 = vst.msk [vmem:[#allocation2] sm:$0x1] %vm849, %v848
    // Predicated region
    $region18: #{fight_predictor.1} parent=1 // pred_check
      _
    $region19: #{fight_predictor.1} parent=1 // pred_check_branch
      %852 = sbr.rel (0) target = $region21
    $region20: #{fight_predictor.1} parent=1 // pred_region
      %s854 = ssub.s32 16, 16
      %855 = vsyncadd [#allocation3], %s854
      %s857 = sshll.u32 [#allocation2], 4
      %s858 = int_to_ptr.vmem [resolvable:$true] %s857
      %860 = dma.vmem_to_hbm [thread:$0]  %s858, 16, %s4, [#allocation3]
    $region21: #{fight_predictor.1} parent=1 // pred_fallthru
      _
    // Predicated region
    $region22: #{fight_predictor.1} parent=1 // pred_check
      _
    $region23: #{fight_predictor.1} parent=1 // pred_check_branch
      %862 = sbr.rel (0) target = $region25
    $region24: #{fight_predictor.1} parent=1 // pred_region
      %863 = dma.done [#allocation3], 16
    $region25: #{fight_predictor.1} parent=1 // pred_fallthru
      _
    %864 = vsyncpa [#allocation3], 1

</llo_original>
